<compile_context>
chip_gen: v7x
topology: tpu7x:2x2x1
jax: 0.10.0
libtpu: 0.0.40
codegen_flags: <defaults>
</compile_context>

<pallas_src>
import functools

import jax
import jax.numpy as jnp
from jax.experimental import pallas as pl
from jax.experimental.pallas import tpu as pltpu


def _vmem_limits():
    """Per-generation (scoped-VMEM limit, tiling budget) in bytes."""
    try:
        phys = int(pltpu.get_tpu_info().vmem_capacity_bytes)
    except Exception:
        phys = 64 * 1024 * 1024  # conservative default: v7x per-TC VMEM
    # Use at most ~3/4 of physical as the scoped limit, capped at 96 MiB
    # (v5e/v6e: 96 MiB limit; v7x: 48 MiB limit).
    limit = min((phys * 3) // 4, 96 * 1024 * 1024)
    limit = max(limit, 32 * 1024 * 1024)
    budget = (limit * 3) // 4  # headroom for Mosaic internal scratch / rounding
    return budget, limit


def _weighted_avg_kernel(tok_ref, ch_ref, a_ref, b_ref, out_ref, *, n_tok, n_ch):
    # tok_ref: (L_tok, TT, TD)        ch_ref: (L_ch, TT, TD)
    # a_ref:   (L_tok, TT, 1)  f32    (already scaled by 0.5 / L_tok)
    # b_ref:   (L_ch,  TT, 1)  f32    (already scaled by 0.5 / L_ch)
    # out_ref: (TT, TD)
    # Unrolled accumulation over L into a single f32 accumulator — no
    # (L, TT, TD) broadcast-product temporary, exact f32 accumulation for
    # bf16 inputs, cast to output dtype only at the store.
    acc = tok_ref[0].astype(jnp.float32) * a_ref[0]
    for l in range(1, n_tok):
        acc = acc + tok_ref[l].astype(jnp.float32) * a_ref[l]
    for l in range(n_ch):
        acc = acc + ch_ref[l].astype(jnp.float32) * b_ref[l]
    out_ref[...] = acc.astype(out_ref.dtype)


def _pick_tile_d(D, cap=1024):
    """Lane tile: largest multiple of 128 dividing D (<= cap), else full D."""
    if D % 128 != 0:
        return D  # full extent (always a legal last block dim)
    best = 128
    d = 128
    while d <= min(D, cap):
        if D % d == 0:
            best = d
        d += 128
    return best


def _pick_tile_t(T, row_cap):
    """Sublane tile: full extent if it fits, else largest multiple of 8 <= cap."""
    if T <= row_cap:
        return T
    return max(8, (row_cap // 8) * 8)


def weighted_average_from_previous_mixers(token_mixer_outputs,
                                          channel_mixer_outputs,
                                          alphas, betas):
    """token_mixer_outputs: [B, L_tok, T, D]; channel_mixer_outputs: [B, L_ch, T, D]
    alphas: [L_tok, T]; betas: [L_ch, T]  ->  [B, T, D]"""
    B, L_tok, T, D = token_mixer_outputs.shape
    L_ch = channel_mixer_outputs.shape[1]
    out_dtype = token_mixer_outputs.dtype

    # Fold /L_tok, /L_ch and the final *0.5 into the tiny (L, T, 1) f32 params
    # so the kernel is a pure fused cast*scale+add chain.
    a3 = (alphas.astype(jnp.float32) * (0.5 / L_tok))[:, :, None]   # (L_tok, T, 1)
    b3 = (betas.astype(jnp.float32) * (0.5 / L_ch))[:, :, None]     # (L_ch,  T, 1)

    budget, vmem_limit = _vmem_limits()
    in_b = jnp.dtype(token_mixer_outputs.dtype).itemsize
    out_b = jnp.dtype(out_dtype).itemsize
    L_all = L_tok + L_ch

    tile_d = _pick_tile_d(D)

    # Per-row (along T) VMEM bytes for a tile:
    #   activations: double-buffered input blocks, tile_d lanes wide
    #   output:      double-buffered
    #   accumulator + cast temporary (f32, single-buffered): ~2 x tile_d x 4
    #   params:      (L, tile_t, 1) blocks are lane-padded to 128, f32, 2-buffered
    per_row = (tile_d * (2 * L_all * in_b + 2 * out_b + 2 * 4)
               + 128 * 4 * 2 * L_all)
    row_cap = max(8, budget // per_row)
    tile_t = _pick_tile_t(T, row_cap)

    n_t = pl.cdiv(T, tile_t)
    n_d = pl.cdiv(D, tile_d)

    kernel = functools.partial(_weighted_avg_kernel, n_tok=L_tok, n_ch=L_ch)

    tok_block = (None, L_tok, tile_t, tile_d)
    ch_block = (None, L_ch, tile_t, tile_d)
    a_block = (L_tok, tile_t, 1)
    b_block = (L_ch, tile_t, 1)
    out_block = (None, tile_t, tile_d)

    if n_t > 1 or B == 1:
        # T-tiles outermost, batch innermost: the param block index depends
        # only on ti, so consecutive (di, bi) steps revisit the same block and
        # Pallas skips the copy-in -> params DMA'd once per T tile.
        grid = (n_t, n_d, B)
        act_map = lambda ti, di, bi: (bi, 0, ti, di)
        par_map = lambda ti, di, bi: (0, ti, 0)
        out_map = lambda ti, di, bi: (bi, ti, di)
    else:
        # Single T tile: put batch outermost so the megacore (v7x) parallel
        # axis has extent >= 2.  Param block index is constant -> loaded once.
        grid = (B, n_d, n_t)
        act_map = lambda bi, di, ti: (bi, 0, ti, di)
        par_map = lambda bi, di, ti: (0, ti, 0)
        out_map = lambda bi, di, ti: (bi, ti, di)

    return pl.pallas_call(
        kernel,
        out_shape=jax.ShapeDtypeStruct((B, T, D), out_dtype),
        grid=grid,
        in_specs=[
            pl.BlockSpec(tok_block, act_map),
            pl.BlockSpec(ch_block, act_map),
            pl.BlockSpec(a_block, par_map),
            pl.BlockSpec(b_block, par_map),
        ],
        out_specs=pl.BlockSpec(out_block, out_map),
        compiler_params=pltpu.CompilerParams(
            dimension_semantics=("parallel", "parallel", "parallel"),
            vmem_limit_bytes=vmem_limit,
        ),
    )(token_mixer_outputs, channel_mixer_outputs, a3, b3)


def _reference(tok, ch, alphas, betas):
    L_tok = tok.shape[1]
    L_ch = ch.shape[1]
    alpha_term = jnp.einsum('bltd,lt->btd', tok.astype(jnp.float32),
                            alphas.astype(jnp.float32)) / L_tok
    beta_term = jnp.einsum('bltd,lt->btd', ch.astype(jnp.float32),
                           betas.astype(jnp.float32)) / L_ch
    return ((alpha_term + beta_term) / 2.0).astype(tok.dtype)


if __name__ == "__main__":
    key = jax.random.PRNGKey(0)

    # --- Test 1: module-sized shapes (small, unaligned D) ---
    B, L_tok, L_ch, T, D = 2, 3, 2, 8, 32
    k1, k2, k3, k4, key = jax.random.split(key, 5)
    tok = jax.random.normal(k1, (B, L_tok, T, D), jnp.float32)
    ch = jax.random.normal(k2, (B, L_ch, T, D), jnp.float32)
    alphas = jnp.ones((L_tok, T), jnp.float32) + 0.1 * jax.random.normal(k3, (L_tok, T))
    betas = jnp.ones((L_ch, T), jnp.float32) + 0.1 * jax.random.normal(k4, (L_ch, T))

    out = jax.block_until_ready(
        weighted_average_from_previous_mixers(tok, ch, alphas, betas))
    ref = _reference(tok, ch, alphas, betas)
    assert out.shape == (B, T, D), out.shape
    assert jnp.allclose(out, ref, atol=1e-5, rtol=1e-5), \
        float(jnp.max(jnp.abs(out - ref)))

    # --- Test 2: lane-aligned D (production-style path, D % 128 == 0) ---
    B2, T2, D2 = 2, 16, 128
    k1, k2, k3, k4, key = jax.random.split(key, 5)
    tok2 = jax.random.normal(k1, (B2, L_tok, T2, D2), jnp.float32)
    ch2 = jax.random.normal(k2, (B2, L_ch, T2, D2), jnp.float32)
    alphas2 = jnp.ones((L_tok, T2), jnp.float32) + 0.1 * jax.random.normal(k3, (L_tok, T2))
    betas2 = jnp.ones((L_ch, T2), jnp.float32) + 0.1 * jax.random.normal(k4, (L_ch, T2))

    out2 = jax.block_until_ready(
        weighted_average_from_previous_mixers(tok2, ch2, alphas2, betas2))
    ref2 = _reference(tok2, ch2, alphas2, betas2)
    assert out2.shape == (B2, T2, D2), out2.shape
    assert jnp.allclose(out2, ref2, atol=1e-5, rtol=1e-5), \
        float(jnp.max(jnp.abs(out2 - ref2)))

    print("KERNEL_OK")
</pallas_src>

<mosaic_0001>
module attributes {stable_mosaic.version = 11 : i64} {
  func.func @_weighted_avg_kernel(%arg0: i32, %arg1: i32, %arg2: i32, %arg3: memref<1x3x8x32xf32, #tpu.memory_space<vmem>>, %arg4: memref<1x2x8x32xf32, #tpu.memory_space<vmem>>, %arg5: memref<3x8x1xf32, #tpu.memory_space<vmem>>, %arg6: memref<2x8x1xf32, #tpu.memory_space<vmem>>, %arg7: memref<1x8x32xf32, #tpu.memory_space<vmem>>) attributes {dimension_semantics = [#tpu.dimension_semantics<parallel>, #tpu.dimension_semantics<parallel>, #tpu.dimension_semantics<parallel>], iteration_bounds = array<i64: 2, 1, 1>, scalar_prefetch = 0 : i64, scratch_operands = 0 : i64, tpu.core_type = #tpu.core_type<tc>, window_params = [{transform_indices = @transform_0, window_bounds = array<i64: 1, 3, 8, 32>}, {transform_indices = @transform_1, window_bounds = array<i64: 1, 2, 8, 32>}, {transform_indices = @transform_2, window_bounds = array<i64: 3, 8, 1>}, {transform_indices = @transform_3, window_bounds = array<i64: 2, 8, 1>}, {transform_indices = @transform_4, window_bounds = array<i64: 1, 8, 32>}]} {
    %c0 = arith.constant 0 : index
    %c0_0 = arith.constant 0 : index
    %c0_1 = arith.constant 0 : index
    %c0_2 = arith.constant 0 : index
    %0 = vector.load %arg3[%c0, %c0_0, %c0_1, %c0_2] : memref<1x3x8x32xf32, #tpu.memory_space<vmem>>, vector<1x1x8x32xf32>
    %1 = vector.shape_cast %0 : vector<1x1x8x32xf32> to vector<8x32xf32>
    %c0_3 = arith.constant 0 : index
    %c0_4 = arith.constant 0 : index
    %c0_5 = arith.constant 0 : index
    %2 = vector.load %arg5[%c0_3, %c0_4, %c0_5] : memref<3x8x1xf32, #tpu.memory_space<vmem>>, vector<1x8x1xf32>
    %3 = vector.shape_cast %2 : vector<1x8x1xf32> to vector<8x1xf32>
    %4 = vector.broadcast %3 : vector<8x1xf32> to vector<8x32xf32>
    %5 = arith.mulf %1, %4 : vector<8x32xf32>
    %c0_6 = arith.constant 0 : index
    %c1 = arith.constant 1 : index
    %c0_7 = arith.constant 0 : index
    %c0_8 = arith.constant 0 : index
    %6 = vector.load %arg3[%c0_6, %c1, %c0_7, %c0_8] : memref<1x3x8x32xf32, #tpu.memory_space<vmem>>, vector<1x1x8x32xf32>
    %7 = vector.shape_cast %6 : vector<1x1x8x32xf32> to vector<8x32xf32>
    %c1_9 = arith.constant 1 : index
    %c0_10 = arith.constant 0 : index
    %c0_11 = arith.constant 0 : index
    %8 = vector.load %arg5[%c1_9, %c0_10, %c0_11] : memref<3x8x1xf32, #tpu.memory_space<vmem>>, vector<1x8x1xf32>
    %9 = vector.shape_cast %8 : vector<1x8x1xf32> to vector<8x1xf32>
    %10 = vector.broadcast %9 : vector<8x1xf32> to vector<8x32xf32>
    %11 = arith.mulf %7, %10 : vector<8x32xf32>
    %12 = arith.addf %5, %11 : vector<8x32xf32>
    %c0_12 = arith.constant 0 : index
    %c2 = arith.constant 2 : index
    %c0_13 = arith.constant 0 : index
    %c0_14 = arith.constant 0 : index
    %13 = vector.load %arg3[%c0_12, %c2, %c0_13, %c0_14] : memref<1x3x8x32xf32, #tpu.memory_space<vmem>>, vector<1x1x8x32xf32>
    %14 = vector.shape_cast %13 : vector<1x1x8x32xf32> to vector<8x32xf32>
    %c2_15 = arith.constant 2 : index
    %c0_16 = arith.constant 0 : index
    %c0_17 = arith.constant 0 : index
    %15 = vector.load %arg5[%c2_15, %c0_16, %c0_17] : memref<3x8x1xf32, #tpu.memory_space<vmem>>, vector<1x8x1xf32>
    %16 = vector.shape_cast %15 : vector<1x8x1xf32> to vector<8x1xf32>
    %17 = vector.broadcast %16 : vector<8x1xf32> to vector<8x32xf32>
    %18 = arith.mulf %14, %17 : vector<8x32xf32>
    %19 = arith.addf %12, %18 : vector<8x32xf32>
    %c0_18 = arith.constant 0 : index
    %c0_19 = arith.constant 0 : index
    %c0_20 = arith.constant 0 : index
    %c0_21 = arith.constant 0 : index
    %20 = vector.load %arg4[%c0_18, %c0_19, %c0_20, %c0_21] : memref<1x2x8x32xf32, #tpu.memory_space<vmem>>, vector<1x1x8x32xf32>
    %21 = vector.shape_cast %20 : vector<1x1x8x32xf32> to vector<8x32xf32>
    %c0_22 = arith.constant 0 : index
    %c0_23 = arith.constant 0 : index
    %c0_24 = arith.constant 0 : index
    %22 = vector.load %arg6[%c0_22, %c0_23, %c0_24] : memref<2x8x1xf32, #tpu.memory_space<vmem>>, vector<1x8x1xf32>
    %23 = vector.shape_cast %22 : vector<1x8x1xf32> to vector<8x1xf32>
    %24 = vector.broadcast %23 : vector<8x1xf32> to vector<8x32xf32>
    %25 = arith.mulf %21, %24 : vector<8x32xf32>
    %26 = arith.addf %19, %25 : vector<8x32xf32>
    %c0_25 = arith.constant 0 : index
    %c1_26 = arith.constant 1 : index
    %c0_27 = arith.constant 0 : index
    %c0_28 = arith.constant 0 : index
    %27 = vector.load %arg4[%c0_25, %c1_26, %c0_27, %c0_28] : memref<1x2x8x32xf32, #tpu.memory_space<vmem>>, vector<1x1x8x32xf32>
    %28 = vector.shape_cast %27 : vector<1x1x8x32xf32> to vector<8x32xf32>
    %c1_29 = arith.constant 1 : index
    %c0_30 = arith.constant 0 : index
    %c0_31 = arith.constant 0 : index
    %29 = vector.load %arg6[%c1_29, %c0_30, %c0_31] : memref<2x8x1xf32, #tpu.memory_space<vmem>>, vector<1x8x1xf32>
    %30 = vector.shape_cast %29 : vector<1x8x1xf32> to vector<8x1xf32>
    %31 = vector.broadcast %30 : vector<8x1xf32> to vector<8x32xf32>
    %32 = arith.mulf %28, %31 : vector<8x32xf32>
    %33 = arith.addf %26, %32 : vector<8x32xf32>
    %c0_32 = arith.constant 0 : index
    %c0_33 = arith.constant 0 : index
    %c0_34 = arith.constant 0 : index
    %34 = vector.load %arg7[%c0_32, %c0_33, %c0_34] : memref<1x8x32xf32, #tpu.memory_space<vmem>>, vector<1x8x32xf32>
    %35 = vector.shape_cast %34 : vector<1x8x32xf32> to vector<8x32xf32>
    %36 = vector.shape_cast %33 : vector<8x32xf32> to vector<1x8x32xf32>
    tpu.vector_store %arg7[%c0_32, %c0_33, %c0_34], %36 {strides = array<i32>} : memref<1x8x32xf32, #tpu.memory_space<vmem>>, vector<1x8x32xf32>,
    return
  }
  func.func @transform_0(%arg0: i32, %arg1: i32, %arg2: i32) -> (i32, i32, i32, i32) {
    %c0_i32 = arith.constant 0 : i32
    %c0_i32_0 = arith.constant 0 : i32
    return %arg0, %c0_i32, %arg2, %arg1 : i32, i32, i32, i32
  }
  func.func @transform_1(%arg0: i32, %arg1: i32, %arg2: i32) -> (i32, i32, i32, i32) {
    %c0_i32 = arith.constant 0 : i32
    %c0_i32_0 = arith.constant 0 : i32
    return %arg0, %c0_i32, %arg2, %arg1 : i32, i32, i32, i32
  }
  func.func @transform_2(%arg0: i32, %arg1: i32, %arg2: i32) -> (i32, i32, i32) {
    %c0_i32 = arith.constant 0 : i32
    %c0_i32_0 = arith.constant 0 : i32
    %c0_i32_1 = arith.constant 0 : i32
    return %c0_i32, %arg2, %c0_i32_0 : i32, i32, i32
  }
  func.func @transform_3(%arg0: i32, %arg1: i32, %arg2: i32) -> (i32, i32, i32) {
    %c0_i32 = arith.constant 0 : i32
    %c0_i32_0 = arith.constant 0 : i32
    %c0_i32_1 = arith.constant 0 : i32
    return %c0_i32, %arg2, %c0_i32_0 : i32, i32, i32
  }
  func.func @transform_4(%arg0: i32, %arg1: i32, %arg2: i32) -> (i32, i32, i32) {
    %c0_i32 = arith.constant 0 : i32
    return %arg0, %arg2, %arg1 : i32, i32, i32
  }
}

</mosaic_0001>

<llo_original>
// kernel: tpu_custom_call.1
$region0: #{tpu_custom_call.1}
  #allocation0 [shape = 'u32[]', space=smem, size = 0x4, offset = 0x4, fixed_abs, tag = 'smem constant byte address 0x4 - core index']
  #allocation1 [shape = 'u32[144,128]{1,0:T(1,128)}', space=vmem, size = 0x12000, scoped, tag = 'internal scratch']
  %s0 = inlined_call_operand.hbm [shape: f32[2,3,8,32], index: 0, kind: input, shape index: {}]
  %s1 = inlined_call_operand.vmem [shape: f32[2,2,8,32], index: 1, kind: input, shape index: {}]
  %s2 = inlined_call_operand.vmem [shape: f32[3,8,1], index: 2, kind: input, shape index: {}]
  %s3 = inlined_call_operand.vmem [shape: f32[2,8,1], index: 3, kind: input, shape index: {}]
  %s4 = inlined_call_operand.hbm [shape: f32[2,8,32], index: 4, kind: output, shape index: {}]
  %s5 = sld [smem:[#allocation0]]
  $region53: #{tpu_custom_call.1} parent=0
    _
  %s7 = ssub.s32 1, %s5
  %s8 = scalar_select 0, %s7, %s5
  $region1: #{tpu_custom_call.1} parent=0
    #allocation2 [shape = 'u8[24576]{0}', space=vmem, size = 0x6000, scoped, tag = 'input window, operand 0']
    #allocation3 [shape = 's32[2]{0}', space=sflag, size = 0x8, scoped, tag = 'scoped memory for tpu_custom_call.1']
    #allocation4 [shape = 's32[2]{0}', space=sflag, size = 0x8, scoped, tag = 'scoped memory for tpu_custom_call.1']
    #allocation5 [shape = 'u8[8192]{0}', space=vmem, size = 0x2000, scoped, tag = 'output window, operand 0']
    %9 = vsyncpa [#allocation3], 0
    %s10 = scalar_lea.sflag [#allocation3], 1
    %11 = vsyncpa %s10, 0
    %12 = vsyncpa [#allocation4], 0
    %s13 = scalar_lea.sflag [#allocation4], 1
    %14 = vsyncpa %s13, 0
    loop: start=0, step=1, limit=4
    $region2: #{tpu_custom_call.1} parent=1 // loop_pre_header
      _
    $region3: #{tpu_custom_call.1} parent=1 // loop_header
      %s16 = sphi 0, %s20
      %p17 = scmp.ge.s32.totalorder %s16, 4
      %s23 = sphi 0, %s42
      %s24 = sphi 0, %s38
      %s25 = sphi 0, %s34
      %s26 = sphi 0, %s23
      %s27 = sphi 0, %s24
      %s28 = sphi 0, %s25
      %s29 = sphi 0, %s26
      %s30 = sphi 0, %s27
      %s31 = sphi 0, %s28
      %s49 = sphi 0, %s51
      %s52 = sphi 0, %s49
      %s53 = sphi 0, %s52
      %s69 = sphi 0, %s53
      %s79 = sphi 0, %s81
      %s82 = sphi 0, %s79
      %s83 = sphi 0, %s82
      %s99 = sphi 0, %s83
      %s105 = sphi 0, %s107
      %s108 = sphi 0, %s105
      %s109 = sphi 0, %s108
      %s125 = sphi 0, %s109
      %s131 = sphi 0, %s133
      %s134 = sphi 0, %s131
      %s135 = sphi 0, %s134
      %s151 = sphi 0, %s135
      %s161 = sphi 0, %s163
      %s164 = sphi 0, %s161
      %s165 = sphi 0, %s164
      %s181 = sphi 0, %s165
    $region4: #{tpu_custom_call.1} parent=1 // loop_header_branch
      %19 = sbr.rel (%p17) target = $region8
    $region5: #{tpu_custom_call.1} parent=1 // loop_body
      %s21 = ssub.s32 %s16, 1
      %s22 = ssub.s32 %s16, 2
      %s32 = sadd.s32 1, %s25
      %p33 = scmp.ge.s32.totalorder %s32, 1
      %s34 = scalar_select %p33, 0, %s32
      %s35 = sadd.s32 1, %s24
      %s36 = scalar_select %p33, %s35, %s24
      %p37 = scmp.ge.s32.totalorder %s36, 1
      %s38 = scalar_select %p37, 0, %s36
      %s39 = sadd.s32 1, %s23
      %s40 = scalar_select %p37, %s39, %s23
      %p41 = scmp.ge.s32.totalorder %s40, 2
      %s42 = scalar_select %p41, 0, %s40
      %s43 = ssub.s32 %s23, %s42
      %s44 = ssub.s32 %s25, %s34
      %s45 = sor.u32 %s43, %s44
      %s46 = ssub.s32 %s24, %s38
      %s47 = sor.u32 %s45, %s46
      %p48 = scmp.eq.s32.totalorder %s47, 0
      %s50 = sadd.s32 %s49, 1
      %s51 = scalar_select %p48, %s49, %s50
      %p54 = pneg %p48
      %p55 = scmp.eq.s32.totalorder %s16, 1
      %p56 = por %p54, %p55
      %p57 = scmp.ne.s32.totalorder %s49, %s52
      %p58 = scmp.eq.s32.totalorder %s16, 0
      %p59 = por %p57, %p58
      %p60 = scmp.ne.s32.totalorder %s49, %s52
      %p61 = scmp.eq.s32.totalorder %s21, 1
      %p62 = por %p60, %p61
      %p63 = scmp.ne.s32.totalorder %s52, %s53
      %p64 = scmp.eq.s32.totalorder %s21, 0
      %p65 = por %p63, %p64
      %p66 = scmp.ne.s32.totalorder %s52, %s53
      %p67 = scmp.eq.s32.totalorder %s22, 1
      %p68 = por %p66, %p67
      %p70 = scmp.ne.s32.totalorder %s53, %s69
      %p71 = scmp.eq.s32.totalorder %s22, 0
      %p72 = por %p70, %p71
      %s73 = ssub.s32 %s23, %s42
      %s74 = ssub.s32 %s25, %s34
      %s75 = sor.u32 %s73, %s74
      %s76 = ssub.s32 %s24, %s38
      %s77 = sor.u32 %s75, %s76
      %p78 = scmp.eq.s32.totalorder %s77, 0
      %s80 = sadd.s32 %s79, 1
      %s81 = scalar_select %p78, %s79, %s80
      %p84 = pneg %p78
      %p85 = scmp.eq.s32.totalorder %s16, 1
      %p86 = por %p84, %p85
      %p87 = scmp.ne.s32.totalorder %s79, %s82
      %p88 = scmp.eq.s32.totalorder %s16, 0
      %p89 = por %p87, %p88
      %p90 = scmp.ne.s32.totalorder %s79, %s82
      %p91 = scmp.eq.s32.totalorder %s21, 1
      %p92 = por %p90, %p91
      %p93 = scmp.ne.s32.totalorder %s82, %s83
      %p94 = scmp.eq.s32.totalorder %s21, 0
      %p95 = por %p93, %p94
      %p96 = scmp.ne.s32.totalorder %s82, %s83
      %p97 = scmp.eq.s32.totalorder %s22, 1
      %p98 = por %p96, %p97
      %p100 = scmp.ne.s32.totalorder %s83, %s99
      %p101 = scmp.eq.s32.totalorder %s22, 0
      %p102 = por %p100, %p101
      %s103 = ssub.s32 %s25, %s34
      %p104 = scmp.eq.s32.totalorder %s103, 0
      %s106 = sadd.s32 %s105, 1
      %s107 = scalar_select %p104, %s105, %s106
      %p110 = pneg %p104
      %p111 = scmp.eq.s32.totalorder %s16, 1
      %p112 = por %p110, %p111
      %p113 = scmp.ne.s32.totalorder %s105, %s108
      %p114 = scmp.eq.s32.totalorder %s16, 0
      %p115 = por %p113, %p114
      %p116 = scmp.ne.s32.totalorder %s105, %s108
      %p117 = scmp.eq.s32.totalorder %s21, 1
      %p118 = por %p116, %p117
      %p119 = scmp.ne.s32.totalorder %s108, %s109
      %p120 = scmp.eq.s32.totalorder %s21, 0
      %p121 = por %p119, %p120
      %p122 = scmp.ne.s32.totalorder %s108, %s109
      %p123 = scmp.eq.s32.totalorder %s22, 1
      %p124 = por %p122, %p123
      %p126 = scmp.ne.s32.totalorder %s109, %s125
      %p127 = scmp.eq.s32.totalorder %s22, 0
      %p128 = por %p126, %p127
      %s129 = ssub.s32 %s25, %s34
      %p130 = scmp.eq.s32.totalorder %s129, 0
      %s132 = sadd.s32 %s131, 1
      %s133 = scalar_select %p130, %s131, %s132
      %p136 = pneg %p130
      %p137 = scmp.eq.s32.totalorder %s16, 1
      %p138 = por %p136, %p137
      %p139 = scmp.ne.s32.totalorder %s131, %s134
      %p140 = scmp.eq.s32.totalorder %s16, 0
      %p141 = por %p139, %p140
      %p142 = scmp.ne.s32.totalorder %s131, %s134
      %p143 = scmp.eq.s32.totalorder %s21, 1
      %p144 = por %p142, %p143
      %p145 = scmp.ne.s32.totalorder %s134, %s135
      %p146 = scmp.eq.s32.totalorder %s21, 0
      %p147 = por %p145, %p146
      %p148 = scmp.ne.s32.totalorder %s134, %s135
      %p149 = scmp.eq.s32.totalorder %s22, 1
      %p150 = por %p148, %p149
      %p152 = scmp.ne.s32.totalorder %s135, %s151
      %p153 = scmp.eq.s32.totalorder %s22, 0
      %p154 = por %p152, %p153
      %s155 = ssub.s32 %s23, %s42
      %s156 = ssub.s32 %s25, %s34
      %s157 = sor.u32 %s155, %s156
      %s158 = ssub.s32 %s24, %s38
      %s159 = sor.u32 %s157, %s158
      %p160 = scmp.eq.s32.totalorder %s159, 0
      %s162 = sadd.s32 %s161, 1
      %s163 = scalar_select %p160, %s161, %s162
      %p166 = pneg %p160
      %p167 = scmp.eq.s32.totalorder %s16, 1
      %p168 = por %p166, %p167
      %p169 = scmp.ne.s32.totalorder %s161, %s164
      %p170 = scmp.eq.s32.totalorder %s16, 0
      %p171 = por %p169, %p170
      %p172 = scmp.ne.s32.totalorder %s161, %s164
      %p173 = scmp.eq.s32.totalorder %s21, 1
      %p174 = por %p172, %p173
      %p175 = scmp.ne.s32.totalorder %s164, %s165
      %p176 = scmp.eq.s32.totalorder %s21, 0
      %p177 = por %p175, %p176
      %p178 = scmp.ne.s32.totalorder %s164, %s165
      %p179 = scmp.eq.s32.totalorder %s22, 1
      %p180 = por %p178, %p179
      %p182 = scmp.ne.s32.totalorder %s165, %s181
      %p183 = scmp.eq.s32.totalorder %s22, 0
      %p184 = por %p182, %p183
      %p185 = scmp.le.s32.totalorder 1, %s16
      %p186 = scmp.lt.s32.totalorder %s16, 3
      %p187 = pnand %p185, %p186
      %p188 = pneg %p187
      // Predicated region
      $region9: #{tpu_custom_call.1} parent=5 // pred_check
        _
      $region10: #{tpu_custom_call.1} parent=5 // pred_check_branch
        %190 = sbr.rel (%p187) target = $region12
      $region11: #{tpu_custom_call.1} parent=5 // pred_region
        %s191 = ssub.s32 %s16, 1
        // Predicated region
        $region13: #{tpu_custom_call.1} parent=11 // pred_check
          %p192 = pneg %p121
        $region14: #{tpu_custom_call.1} parent=11 // pred_check_branch
          %194 = sbr.rel (%p192) target = $region16
        $region15: #{tpu_custom_call.1} parent=11 // pred_region
          %p195 = scmp.lt.s32.totalorder %s28, 0
          %s196 = scalar_select %p195, %s28, 0
          %s197 = smul.addr %s196, 8
          %s198 = scalar_lea.vmem %s2, %s197
        $region16: #{tpu_custom_call.1} parent=11 // pred_fallthru
          _
        // Predicated region
        $region17: #{tpu_custom_call.1} parent=11 // pred_check
          %p199 = pneg %p147
        $region18: #{tpu_custom_call.1} parent=11 // pred_check_branch
          %201 = sbr.rel (%p199) target = $region20
        $region19: #{tpu_custom_call.1} parent=11 // pred_region
          %p202 = scmp.lt.s32.totalorder %s28, 0
          %s203 = scalar_select %p202, %s28, 0
          %s204 = smul.addr %s203, 8
          %s205 = scalar_lea.vmem %s3, %s204
        $region20: #{tpu_custom_call.1} parent=11 // pred_fallthru
          _
      $region12: #{tpu_custom_call.1} parent=5 // pred_fallthru
        _
      %p206 = scmp.lt.s32.totalorder %s16, 2
      // Predicated region
      $region21: #{tpu_custom_call.1} parent=5 // pred_check
        %p207 = pneg %p206
      $region22: #{tpu_custom_call.1} parent=5 // pred_check_branch
        %209 = sbr.rel (%p207) target = $region24
      $region23: #{tpu_custom_call.1} parent=5 // pred_region
        // Predicated region
        $region25: #{tpu_custom_call.1} parent=23 // pred_check
          %p210 = pneg %p59
        $region26: #{tpu_custom_call.1} parent=23 // pred_check_branch
          %212 = sbr.rel (%p210) target = $region28
        $region27: #{tpu_custom_call.1} parent=23 // pred_region
          %s213 = sand.u32 %s49, 1
          %s214 = scalar_lea.sflag [#allocation3], %s213
          %s215 = sand.u32 %s49, 1
          %s216 = smul.addr %s215, 24
          %s217 = scalar_lea.vmem [#allocation2], %s216
          %s219 = ssub.s32 384, 384
          %220 = vsyncadd %s214, %s219
          %s221 = sadd.s32 %s24, %s25
          %s222 = smul.addr %s23, 3
          %s223 = sadd.s32 %s221, %s222
          %s224 = smul.addr %s223, 128
          %s225 = scalar_lea.hbm %s0, %s224
          %s226 = sshll.u32 %s217, 4
          %s227 = int_to_ptr.vmem [resolvable:$true] %s226
          %232 = dma.hbm_to_vmem [thread:$0]  %s225, 384, %s227, %s214, 128, 128, 8
        $region28: #{tpu_custom_call.1} parent=23 // pred_fallthru
          _
        // Predicated region
        $region29: #{tpu_custom_call.1} parent=23 // pred_check
          %p233 = pneg %p89
        $region30: #{tpu_custom_call.1} parent=23 // pred_check_branch
          %235 = sbr.rel (%p233) target = $region32
        $region31: #{tpu_custom_call.1} parent=23 // pred_region
          %p236 = scmp.lt.s32.totalorder %s23, 1
          %s237 = scalar_select %p236, %s23, 1
          %p238 = scmp.lt.s32.totalorder %s25, 0
          %s239 = scalar_select %p238, %s25, 0
          %p240 = scmp.lt.s32.totalorder %s24, 0
          %s241 = scalar_select %p240, %s24, 0
          %s242 = sadd.s32 %s241, %s239
          %s243 = smul.addr %s237, 2
          %s244 = sadd.s32 %s242, %s243
          %s245 = smul.addr %s244, 8
          %s246 = scalar_lea.vmem %s1, %s245
        $region32: #{tpu_custom_call.1} parent=23 // pred_fallthru
          _
      $region24: #{tpu_custom_call.1} parent=5 // pred_fallthru
        _
      %p247 = scmp.le.s32.totalorder 1, %s16
      %p248 = scmp.lt.s32.totalorder %s16, 3
      %p249 = pnand %p247, %p248
      %p250 = pneg %p249
      // Predicated region
      $region33: #{tpu_custom_call.1} parent=5 // pred_check
        _
      $region34: #{tpu_custom_call.1} parent=5 // pred_check_branch
        %252 = sbr.rel (%p249) target = $region36
      $region35: #{tpu_custom_call.1} parent=5 // pred_region
        %s253 = ssub.s32 %s16, 1
        %s254 = sand.u32 %s52, 1
        %s255 = scalar_lea.sflag [#allocation3], %s254
        %s256 = sand.u32 %s52, 1
        %s257 = smul.addr %s256, 24
        %s258 = scalar_lea.vmem [#allocation2], %s257
        // Predicated region
        $region37: #{tpu_custom_call.1} parent=35 // pred_check
          %p259 = pneg %p65
        $region38: #{tpu_custom_call.1} parent=35 // pred_check_branch
          %261 = sbr.rel (%p259) target = $region40
        $region39: #{tpu_custom_call.1} parent=35 // pred_region
          %262 = dma.done %s255, 384
        $region40: #{tpu_custom_call.1} parent=35 // pred_fallthru
          _
        %s263 = sand.u32 %s52, 1
        %s264 = scalar_lea.sflag [#allocation3], %s263
        %s265 = sand.u32 %s52, 1
        %s266 = smul.addr %s265, 24
        %s267 = scalar_lea.vmem [#allocation2], %s266
        %p268 = pneg %p65
        %p269 = pneg %p62
        %p270 = scmp.lt.s32.totalorder %s26, 1
        %s271 = scalar_select %p270, %s26, 1
        %p272 = scmp.lt.s32.totalorder %s28, 0
        %s273 = scalar_select %p272, %s28, 0
        %p274 = scmp.lt.s32.totalorder %s27, 0
        %s275 = scalar_select %p274, %s27, 0
        %s276 = sadd.s32 %s275, %s273
        %s277 = smul.addr %s271, 2
        %s278 = sadd.s32 %s276, %s277
        %s279 = smul.addr %s278, 8
        %s280 = scalar_lea.vmem %s1, %s279
        %p281 = pneg %p95
        %p282 = pneg %p92
        %p283 = scmp.lt.s32.totalorder %s28, 0
        %s284 = scalar_select %p283, %s28, 0
        %s285 = smul.addr %s284, 8
        %s286 = scalar_lea.vmem %s2, %s285
        %p287 = pneg %p121
        %p288 = pneg %p118
        %p289 = scmp.lt.s32.totalorder %s28, 0
        %s290 = scalar_select %p289, %s28, 0
        %s291 = smul.addr %s290, 8
        %s292 = scalar_lea.vmem %s3, %s291
        %p293 = pneg %p147
        %p294 = pneg %p144
        %p295 = pneg %p177
        %p296 = pneg %p174
        %s297 = sand.u32 %s164, 1
        %s298 = scalar_lea.sflag [#allocation4], %s297
        %s299 = sand.u32 %s164, 1
        %s300 = smul.addr %s299, 8
        %s301 = scalar_lea.vmem [#allocation5], %s300
        %p302 = scmp.lt.s32.totalorder %s26, 1
        %s303 = scalar_select %p302, %s26, 1
        %p304 = scmp.lt.s32.totalorder %s28, 0
        %s305 = scalar_select %p304, %s28, 0
        %p306 = scmp.lt.s32.totalorder %s27, 0
        %s307 = scalar_select %p306, %s27, 0
        %s308 = sadd.s32 %s307, %s305
        %s309 = smul.addr %s303, 2
        %s310 = sadd.s32 %s308, %s309
        %s311 = smul.addr %s310, 8
        %s312 = scalar_lea.vmem %s1, %s311
        %p313 = scmp.lt.s32.totalorder %s28, 0
        %s314 = scalar_select %p313, %s28, 0
        %s315 = smul.addr %s314, 8
        %s316 = scalar_lea.vmem %s2, %s315
        %p317 = scmp.lt.s32.totalorder %s28, 0
        %s318 = scalar_select %p317, %s28, 0
        %s319 = smul.addr %s318, 8
        %s320 = scalar_lea.vmem %s3, %s319
        %v321 = vld [vmem:[%s258] sm:$0xff]
        %v322 = vld [vmem:[%s316] sm:$0xff]
        %324 = vset.pattern.permute.xlu0 0
        %325 = vperm.xlu0 %324, %v322
        %v326 = vpop.permute.xlu0 %325
        %v328 = vmul.f32 %v321, %v326
        %s329 = scalar_lea.vmem %s258, 8 [#allocation2]
        %v330 = vld [vmem:[%s329] sm:$0xff]
        %s331 = scalar_lea.vmem %s316, 8
        %v332 = vld [vmem:[%s331] sm:$0xff]
        %334 = vset.pattern.permute.xlu0 0
        %335 = vperm.xlu0 %334, %v332
        %v336 = vpop.permute.xlu0 %335
        %v338 = vmul.f32 %v330, %v336
        %v339 = vadd.f32 %v328, %v338
        %s340 = scalar_lea.vmem %s258, 16 [#allocation2]
        %v341 = vld [vmem:[%s340] sm:$0xff]
        %s342 = scalar_lea.vmem %s316, 16
        %v343 = vld [vmem:[%s342] sm:$0xff]
        %345 = vset.pattern.permute.xlu0 0
        %346 = vperm.xlu0 %345, %v343
        %v347 = vpop.permute.xlu0 %346
        %v349 = vmul.f32 %v341, %v347
        %v350 = vadd.f32 %v339, %v349
        %v351 = vld [vmem:[%s312] sm:$0xff]
        %v352 = vld [vmem:[%s320] sm:$0xff]
        %354 = vset.pattern.permute.xlu0 0
        %355 = vperm.xlu0 %354, %v352
        %v356 = vpop.permute.xlu0 %355
        %v358 = vmul.f32 %v351, %v356
        %v359 = vadd.f32 %v350, %v358
        %s360 = scalar_lea.vmem %s312, 8
        %v361 = vld [vmem:[%s360] sm:$0xff]
        %s362 = scalar_lea.vmem %s320, 8
        %v363 = vld [vmem:[%s362] sm:$0xff]
        %365 = vset.pattern.permute.xlu0 0
        %366 = vperm.xlu0 %365, %v363
        %v367 = vpop.permute.xlu0 %366
        %v369 = vmul.f32 %v361, %v367
        %v370 = vadd.f32 %v359, %v369
        %vm371 = vcmask 261120
        %372 = vst.msk [vmem:[%s301] sm:$0xff] %vm371, %v370
        %s373 = sand.u32 %s164, 1
        %s374 = scalar_lea.sflag [#allocation4], %s373
        %s375 = sand.u32 %s164, 1
        %s376 = smul.addr %s375, 8
        %s377 = scalar_lea.vmem [#allocation5], %s376
        // Predicated region
        $region41: #{tpu_custom_call.1} parent=35 // pred_check
          %p378 = pneg %p174
        $region42: #{tpu_custom_call.1} parent=35 // pred_check_branch
          %380 = sbr.rel (%p378) target = $region44
        $region43: #{tpu_custom_call.1} parent=35 // pred_region
          %s382 = ssub.s32 128, 128
          %383 = vsyncadd %s374, %s382
          %s384 = sadd.s32 %s27, %s28
          %s385 = sadd.s32 %s384, %s26
          %s386 = smul.addr %s385, 128
          %s387 = scalar_lea.hbm %s4, %s386
          %s389 = sshll.u32 %s377, 4
          %s390 = int_to_ptr.vmem [resolvable:$true] %s389
          %392 = dma.vmem_to_hbm [thread:$0]  %s390, 128, %s387, %s374
        $region44: #{tpu_custom_call.1} parent=35 // pred_fallthru
          _
      $region36: #{tpu_custom_call.1} parent=5 // pred_fallthru
        _
      %p393 = scmp.le.s32.totalorder 2, %s16
      // Predicated region
      $region45: #{tpu_custom_call.1} parent=5 // pred_check
        %p394 = pneg %p393
      $region46: #{tpu_custom_call.1} parent=5 // pred_check_branch
        %396 = sbr.rel (%p394) target = $region48
      $region47: #{tpu_custom_call.1} parent=5 // pred_region
        %s397 = ssub.s32 %s16, 2
        // Predicated region
        $region49: #{tpu_custom_call.1} parent=47 // pred_check
          %p398 = pneg %p180
        $region50: #{tpu_custom_call.1} parent=47 // pred_check_branch
          %400 = sbr.rel (%p398) target = $region52
        $region51: #{tpu_custom_call.1} parent=47 // pred_region
          %s401 = sand.u32 %s165, 1
          %s402 = scalar_lea.sflag [#allocation4], %s401
          %s403 = sand.u32 %s165, 1
          %s404 = smul.addr %s403, 8
          %s405 = scalar_lea.vmem [#allocation5], %s404
          %406 = dma.done %s402, 128
        $region52: #{tpu_custom_call.1} parent=47 // pred_fallthru
          _
      $region48: #{tpu_custom_call.1} parent=5 // pred_fallthru
        _
    $region6: #{tpu_custom_call.1} parent=1 // loop_footer
      %s20 = sadd.s32 1, %s16
    $region7: #{tpu_custom_call.1} parent=1 // loop_footer_branch
      %15 = sbr.rel target = $region3
    $region8: #{tpu_custom_call.1} parent=1 // loop_exit
      _
    %407 = vsyncpa [#allocation3], 1
    %s408 = scalar_lea.sflag [#allocation3], 1
    %409 = vsyncpa %s408, 1
    %410 = vsyncpa [#allocation4], 1
    %s411 = scalar_lea.sflag [#allocation4], 1
    %412 = vsyncpa %s411, 1

</llo_original>
